<compile_context>
chip_gen: v6e
topology: v6e:2x2x1
jax: 0.10.0
libtpu: 0.0.40
codegen_flags: <defaults>
</compile_context>

<pallas_src>
import jax
import jax.numpy as jnp
from jax.experimental import pallas as pl
from jax.experimental.pallas import tpu as pltpu


# ---------------------------------------------------------------------------
# One-time parameter fold:  W = W1 @ W2,  b = b1 @ W2 + b2  (done at weight load)
# ---------------------------------------------------------------------------
def _fold_kernel(w1_ref, b1_ref, w2_ref, b2_ref, w_ref, b_ref):
    w2 = w2_ref[...]
    w_ref[...] = jnp.dot(
        w1_ref[...], w2, preferred_element_type=jnp.float32
    ).astype(w_ref.dtype)
    b_ref[...] = (
        jnp.dot(b1_ref[...], w2, preferred_element_type=jnp.float32) + b2_ref[...]
    ).astype(b_ref.dtype)


def fold_mlp_params(w1, b1, w2, b2):
    """w1: (in, in); b1: (in,); w2: (in, out); b2: (out,) -> W: (in, out), b: (1, out).

    Weights are stored pre-transposed vs. torch, i.e. (in_features, out_features).
    """
    in_dim = w1.shape[0]
    out_dim = w2.shape[1]
    b1_2d = b1.reshape(1, in_dim)
    b2_2d = b2.reshape(1, out_dim)
    vmem = pltpu.MemorySpace.VMEM
    return pl.pallas_call(
        _fold_kernel,
        out_shape=(
            jax.ShapeDtypeStruct((in_dim, out_dim), w1.dtype),
            jax.ShapeDtypeStruct((1, out_dim), w1.dtype),
        ),
        in_specs=[
            pl.BlockSpec((in_dim, in_dim), lambda: (0, 0), memory_space=vmem),
            pl.BlockSpec((1, in_dim), lambda: (0, 0), memory_space=vmem),
            pl.BlockSpec((in_dim, out_dim), lambda: (0, 0), memory_space=vmem),
            pl.BlockSpec((1, out_dim), lambda: (0, 0), memory_space=vmem),
        ],
        out_specs=(
            pl.BlockSpec((in_dim, out_dim), lambda: (0, 0), memory_space=vmem),
            pl.BlockSpec((1, out_dim), lambda: (0, 0), memory_space=vmem),
        ),
        compiler_params=pltpu.CompilerParams(vmem_limit_bytes=8 << 20),
    )(w1, b1_2d, w2, b2_2d)


# ---------------------------------------------------------------------------
# Steady-state forward: y = x @ W_fused + b_fused  (single matmul on the MXU)
# ---------------------------------------------------------------------------
def _mlp_fused_kernel(x_ref, w_ref, b_ref, o_ref):
    y = jnp.dot(x_ref[...], w_ref[...], preferred_element_type=jnp.float32)
    o_ref[...] = (y + b_ref[...]).astype(o_ref.dtype)


def _pick_block_b(B):
    """Largest convenient batch tile that divides B (keeps VMEM bounded)."""
    if B <= 512:
        return B
    for cand in (512, 384, 256, 128, 64, 32, 16, 8):
        if B % cand == 0:
            return cand
    return B  # odd large batch: fall back to a single block


def mlp_forward(x, w_fused, b_fused, *, block_b=None):
    """x: (B, in_dim); w_fused: (in_dim, out_dim); b_fused: (1, out_dim)."""
    B, in_dim = x.shape
    out_dim = w_fused.shape[1]

    if block_b is None:
        block_b = _pick_block_b(B)
    grid = (B // block_b,)

    vmem = pltpu.MemorySpace.VMEM
    itemsize = jnp.dtype(x.dtype).itemsize
    cost = pl.CostEstimate(
        flops=2 * B * in_dim * out_dim,
        transcendentals=0,
        bytes_accessed=(x.size + w_fused.size + b_fused.size + B * out_dim) * itemsize,
    )

    return pl.pallas_call(
        _mlp_fused_kernel,
        out_shape=jax.ShapeDtypeStruct((B, out_dim), x.dtype),
        grid=grid,
        in_specs=[
            pl.BlockSpec((block_b, in_dim), lambda i: (i, 0), memory_space=vmem),
            pl.BlockSpec((in_dim, out_dim), lambda i: (0, 0), memory_space=vmem),
            pl.BlockSpec((1, out_dim), lambda i: (0, 0), memory_space=vmem),
        ],
        out_specs=pl.BlockSpec((block_b, out_dim), lambda i: (i, 0), memory_space=vmem),
        compiler_params=pltpu.CompilerParams(
            dimension_semantics=("parallel",),
            vmem_limit_bytes=4 << 20,  # working set < 1 MiB even double-buffered
        ),
        cost_estimate=cost,
    )(x, w_fused, b_fused)


# ---------------------------------------------------------------------------
# Parameter init mirroring torch.nn.Linear's U(-1/sqrt(fan_in), 1/sqrt(fan_in))
# ---------------------------------------------------------------------------
def init_params(key, in_dim=384, out_dim=2, dtype=jnp.float32):
    k1, k2, k3, k4 = jax.random.split(key, 4)
    bound1 = 1.0 / jnp.sqrt(in_dim)   # fc1 fan_in = in_dim
    bound2 = 1.0 / jnp.sqrt(in_dim)   # fc2 fan_in = in_dim (fc1 is in_dim -> in_dim)
    # Stored transposed vs. torch: (in_features, out_features)
    w1 = jax.random.uniform(k1, (in_dim, in_dim), dtype, -bound1, bound1)
    b1 = jax.random.uniform(k2, (in_dim,), dtype, -bound1, bound1)
    w2 = jax.random.uniform(k3, (in_dim, out_dim), dtype, -bound2, bound2)
    b2 = jax.random.uniform(k4, (out_dim,), dtype, -bound2, bound2)
    return w1, b1, w2, b2


if __name__ == "__main__":
    key = jax.random.PRNGKey(0)
    k_in, k_param = jax.random.split(key)

    B, in_dim, out_dim = 8, 384, 2
    x = jax.random.normal(k_in, (B, in_dim), dtype=jnp.float32)
    w1, b1, w2, b2 = init_params(k_param, in_dim=in_dim, out_dim=out_dim)

    # One-time fold (would happen at weight-load time in a serving stack).
    w_fused, b_fused = fold_mlp_params(w1, b1, w2, b2)
    w_fused, b_fused = jax.block_until_ready((w_fused, b_fused))

    out = mlp_forward(x, w_fused, b_fused)
    out = jax.block_until_ready(out)

    # Reference = original (unfolded) module semantics: fc2(fc1(x)), no activation.
    ref = (x @ w1 + b1) @ w2 + b2
    assert out.shape == (B, out_dim)
    assert jnp.allclose(out, ref, atol=1e-4, rtol=1e-4), "mismatch vs reference"

    print("KERNEL_OK")
</pallas_src>

<mosaic_0001>
module attributes {stable_mosaic.version = 11 : i64} {
  func.func @_fold_kernel(%arg0: memref<384x384xf32, #tpu.memory_space<vmem>>, %arg1: memref<1x384xf32, #tpu.memory_space<vmem>>, %arg2: memref<384x2xf32, #tpu.memory_space<vmem>>, %arg3: memref<1x2xf32, #tpu.memory_space<vmem>>, %arg4: memref<384x2xf32, #tpu.memory_space<vmem>>, %arg5: memref<1x2xf32, #tpu.memory_space<vmem>>) attributes {dimension_semantics = [], scalar_prefetch = 0 : i64, scratch_operands = 0 : i64, tpu.core_type = #tpu.core_type<tc>} {
    %c0 = arith.constant 0 : index
    %c0_0 = arith.constant 0 : index
    %0 = vector.load %arg2[%c0, %c0_0] : memref<384x2xf32, #tpu.memory_space<vmem>>, vector<384x2xf32>
    %c0_1 = arith.constant 0 : index
    %c0_2 = arith.constant 0 : index
    %1 = vector.load %arg0[%c0_1, %c0_2] : memref<384x384xf32, #tpu.memory_space<vmem>>, vector<384x384xf32>
    %cst = arith.constant dense<0.000000e+00> : vector<384x2xf32>
    %2 = tpu.matmul %1, %0, %cst {dimension_numbers = #tpu.dot_dimension_numbers<[1], [0], [0], [1], [0, 0, 1, 1], [], []>} : vector<384x384xf32>, vector<384x2xf32>, vector<384x2xf32> -> vector<384x2xf32>
    %c0_3 = arith.constant 0 : index
    %c0_4 = arith.constant 0 : index
    %3 = vector.load %arg4[%c0_3, %c0_4] : memref<384x2xf32, #tpu.memory_space<vmem>>, vector<384x2xf32>
    tpu.vector_store %arg4[%c0_3, %c0_4], %2 {strides = array<i32>} : memref<384x2xf32, #tpu.memory_space<vmem>>, vector<384x2xf32>,
    %c0_5 = arith.constant 0 : index
    %c0_6 = arith.constant 0 : index
    %4 = vector.load %arg1[%c0_5, %c0_6] : memref<1x384xf32, #tpu.memory_space<vmem>>, vector<1x384xf32>
    %cst_7 = arith.constant dense<0.000000e+00> : vector<1x2xf32>
    %5 = tpu.matmul %4, %0, %cst_7 {dimension_numbers = #tpu.dot_dimension_numbers<[1], [0], [0], [1], [0, 0, 1, 1], [], []>} : vector<1x384xf32>, vector<384x2xf32>, vector<1x2xf32> -> vector<1x2xf32>
    %c0_8 = arith.constant 0 : index
    %c0_9 = arith.constant 0 : index
    %6 = vector.load %arg3[%c0_8, %c0_9] : memref<1x2xf32, #tpu.memory_space<vmem>>, vector<1x2xf32>
    %7 = arith.addf %5, %6 : vector<1x2xf32>
    %c0_10 = arith.constant 0 : index
    %c0_11 = arith.constant 0 : index
    %8 = vector.load %arg5[%c0_10, %c0_11] : memref<1x2xf32, #tpu.memory_space<vmem>>, vector<1x2xf32>
    tpu.vector_store %arg5[%c0_10, %c0_11], %7 {strides = array<i32>} : memref<1x2xf32, #tpu.memory_space<vmem>>, vector<1x2xf32>,
    return
  }
}

</mosaic_0001>

<llo_original>
// kernel: tpu_custom_call.1
$region0: #{tpu_custom_call.1}
  #allocation0 [shape = 'u32[]', space=smem, size = 0x4, offset = 0x4, fixed_abs, tag = 'smem constant byte address 0x4 - core index']
  #allocation1 [shape = 'u32[144,128]{1,0:T(1,128)}', space=vmem, size = 0x12000, scoped, tag = 'internal scratch']
  %s0 = inlined_call_operand.hbm [shape: f32[384,384], index: 0, kind: input, shape index: {}]
  %s1 = inlined_call_operand.vmem [shape: f32[1,384], index: 1, kind: input, shape index: {}]
  %s2 = inlined_call_operand.vmem [shape: f32[384,2], index: 2, kind: input, shape index: {}]
  %s3 = inlined_call_operand.vmem [shape: f32[1,2], index: 3, kind: input, shape index: {}]
  %s4 = inlined_call_operand.vmem [shape: f32[384,2], index: 4, kind: output, shape index: {0}]
  %s5 = inlined_call_operand.hbm [shape: f32[1,2], index: 5, kind: output, shape index: {1}]
  %6 = xla_tuple %s4, %s5
  %s7 = sld [smem:[#allocation0]]
  $region38: #{tpu_custom_call.1} parent=0
    _
  %s9 = ssub.s32 1, %s7
  %s10 = scalar_select 0, %s9, %s7
  $region1: #{tpu_custom_call.1} parent=0
    #allocation2 [shape = 'u8[589824]{0}', space=vmem, size = 0x90000, scoped, tag = 'input window, operand 0, single buffered']
    #allocation3 [shape = 's32[1]{0}', space=sflag, size = 0x4, scoped, tag = 'scoped memory for tpu_custom_call.1']
    #allocation4 [shape = 's32[1]{0}', space=sflag, size = 0x4, scoped, tag = 'scoped memory for tpu_custom_call.1']
    #allocation5 [shape = 'u8[512]{0}', space=vmem, size = 0x400, scoped, tag = 'output window, operand 1, single buffered']
    %11 = vsyncpa [#allocation3], 0
    %12 = vsyncpa [#allocation4], 0
    // Predicated region
    $region2: #{tpu_custom_call.1} parent=1 // pred_check
      _
    $region3: #{tpu_custom_call.1} parent=1 // pred_check_branch
      %14 = sbr.rel (0) target = $region5
    $region4: #{tpu_custom_call.1} parent=1 // pred_region
      %s16 = ssub.s32 18432, 18432
      %17 = vsyncadd [#allocation3], %s16
      %s18 = sshll.u32 [#allocation2], 4
      %s19 = int_to_ptr.vmem [resolvable:$true] %s18
      %24 = dma.hbm_to_vmem [thread:$0]  %s0, 18432, %s19, [#allocation3], 384, 384, 24
    $region5: #{tpu_custom_call.1} parent=1 // pred_fallthru
      _
    // Predicated region
    $region6: #{tpu_custom_call.1} parent=1 // pred_check
      _
    $region7: #{tpu_custom_call.1} parent=1 // pred_check_branch
      %26 = sbr.rel (0) target = $region9
    $region8: #{tpu_custom_call.1} parent=1 // pred_region
      _
    $region9: #{tpu_custom_call.1} parent=1 // pred_fallthru
      _
    // Predicated region
    $region10: #{tpu_custom_call.1} parent=1 // pred_check
      _
    $region11: #{tpu_custom_call.1} parent=1 // pred_check_branch
      %28 = sbr.rel (0) target = $region13
    $region12: #{tpu_custom_call.1} parent=1 // pred_region
      _
    $region13: #{tpu_custom_call.1} parent=1 // pred_fallthru
      _
    // Predicated region
    $region14: #{tpu_custom_call.1} parent=1 // pred_check
      _
    $region15: #{tpu_custom_call.1} parent=1 // pred_check_branch
      %30 = sbr.rel (0) target = $region17
    $region16: #{tpu_custom_call.1} parent=1 // pred_region
      _
    $region17: #{tpu_custom_call.1} parent=1 // pred_fallthru
      _
    // Predicated region
    $region18: #{tpu_custom_call.1} parent=1 // pred_check
      _
    $region19: #{tpu_custom_call.1} parent=1 // pred_check_branch
      %32 = sbr.rel (0) target = $region21
    $region20: #{tpu_custom_call.1} parent=1 // pred_region
      %33 = dma.done [#allocation3], 18432
    $region21: #{tpu_custom_call.1} parent=1 // pred_fallthru
      _
    %v34 = vld [vmem:[%s2] sm:$0xff]
    %v35 = vld [vmem:[%s2 + $0x8] sm:$0xff]
    %v36 = vld [vmem:[%s2 + $0x10] sm:$0xff]
    %v37 = vld [vmem:[%s2 + $0x18] sm:$0xff]
    %v38 = vld [vmem:[%s2 + $0x20] sm:$0xff]
    %v39 = vld [vmem:[%s2 + $0x28] sm:$0xff]
    %v40 = vld [vmem:[%s2 + $0x30] sm:$0xff]
    %v41 = vld [vmem:[%s2 + $0x38] sm:$0xff]
    %v42 = vld [vmem:[%s2 + $0x40] sm:$0xff]
    %v43 = vld [vmem:[%s2 + $0x48] sm:$0xff]
    %v44 = vld [vmem:[%s2 + $0x50] sm:$0xff]
    %v45 = vld [vmem:[%s2 + $0x58] sm:$0xff]
    %v46 = vld [vmem:[%s2 + $0x60] sm:$0xff]
    %v47 = vld [vmem:[%s2 + $0x68] sm:$0xff]
    %v48 = vld [vmem:[%s2 + $0x70] sm:$0xff]
    %v49 = vld [vmem:[%s2 + $0x78] sm:$0xff]
    %v50 = vld [vmem:[%s2 + $0x80] sm:$0xff]
    %v51 = vld [vmem:[%s2 + $0x88] sm:$0xff]
    %v52 = vld [vmem:[%s2 + $0x90] sm:$0xff]
    %v53 = vld [vmem:[%s2 + $0x98] sm:$0xff]
    %v54 = vld [vmem:[%s2 + $0xa0] sm:$0xff]
    %v55 = vld [vmem:[%s2 + $0xa8] sm:$0xff]
    %v56 = vld [vmem:[%s2 + $0xb0] sm:$0xff]
    %v57 = vld [vmem:[%s2 + $0xb8] sm:$0xff]
    %v58 = vld [vmem:[%s2 + $0xc0] sm:$0xff]
    %v59 = vld [vmem:[%s2 + $0xc8] sm:$0xff]
    %v60 = vld [vmem:[%s2 + $0xd0] sm:$0xff]
    %v61 = vld [vmem:[%s2 + $0xd8] sm:$0xff]
    %v62 = vld [vmem:[%s2 + $0xe0] sm:$0xff]
    %v63 = vld [vmem:[%s2 + $0xe8] sm:$0xff]
    %v64 = vld [vmem:[%s2 + $0xf0] sm:$0xff]
    %v65 = vld [vmem:[%s2 + $0xf8] sm:$0xff]
    %v66 = vld [vmem:[%s2 + $0x100] sm:$0xff]
    %v67 = vld [vmem:[%s2 + $0x108] sm:$0xff]
    %v68 = vld [vmem:[%s2 + $0x110] sm:$0xff]
    %v69 = vld [vmem:[%s2 + $0x118] sm:$0xff]
    %v70 = vld [vmem:[%s2 + $0x120] sm:$0xff]
    %v71 = vld [vmem:[%s2 + $0x128] sm:$0xff]
    %v72 = vld [vmem:[%s2 + $0x130] sm:$0xff]
    %v73 = vld [vmem:[%s2 + $0x138] sm:$0xff]
    %v74 = vld [vmem:[%s2 + $0x140] sm:$0xff]
    %v75 = vld [vmem:[%s2 + $0x148] sm:$0xff]
    %v76 = vld [vmem:[%s2 + $0x150] sm:$0xff]
    %v77 = vld [vmem:[%s2 + $0x158] sm:$0xff]
    %v78 = vld [vmem:[%s2 + $0x160] sm:$0xff]
    %v79 = vld [vmem:[%s2 + $0x168] sm:$0xff]
    %v80 = vld [vmem:[%s2 + $0x170] sm:$0xff]
    %v81 = vld [vmem:[%s2 + $0x178] sm:$0xff]
    %v82 = vld [vmem:[#allocation2] sm:$0xff]
    %v83 = vld [vmem:[#allocation2 + $0x8] sm:$0xff]
    %v84 = vld [vmem:[#allocation2 + $0x10] sm:$0xff]
    %v85 = vld [vmem:[#allocation2 + $0x18] sm:$0xff]
    %v86 = vld [vmem:[#allocation2 + $0x20] sm:$0xff]
    %v87 = vld [vmem:[#allocation2 + $0x28] sm:$0xff]
    %v88 = vld [vmem:[#allocation2 + $0x30] sm:$0xff]
    %v89 = vld [vmem:[#allocation2 + $0x38] sm:$0xff]
    %v90 = vld [vmem:[#allocation2 + $0x40] sm:$0xff]
    %v91 = vld [vmem:[#allocation2 + $0x48] sm:$0xff]
    %v92 = vld [vmem:[#allocation2 + $0x50] sm:$0xff]
    %v93 = vld [vmem:[#allocation2 + $0x58] sm:$0xff]
    %v94 = vld [vmem:[#allocation2 + $0x60] sm:$0xff]
    %v95 = vld [vmem:[#allocation2 + $0x68] sm:$0xff]
    %v96 = vld [vmem:[#allocation2 + $0x70] sm:$0xff]
    %v97 = vld [vmem:[#allocation2 + $0x78] sm:$0xff]
    %v98 = vld [vmem:[#allocation2 + $0x80] sm:$0xff]
    %v99 = vld [vmem:[#allocation2 + $0x88] sm:$0xff]
    %v100 = vld [vmem:[#allocation2 + $0x90] sm:$0xff]
    %v101 = vld [vmem:[#allocation2 + $0x98] sm:$0xff]
    %v102 = vld [vmem:[#allocation2 + $0xa0] sm:$0xff]
    %v103 = vld [vmem:[#allocation2 + $0xa8] sm:$0xff]
    %v104 = vld [vmem:[#allocation2 + $0xb0] sm:$0xff]
    %v105 = vld [vmem:[#allocation2 + $0xb8] sm:$0xff]
    %v106 = vld [vmem:[#allocation2 + $0xc0] sm:$0xff]
    %v107 = vld [vmem:[#allocation2 + $0xc8] sm:$0xff]
    %v108 = vld [vmem:[#allocation2 + $0xd0] sm:$0xff]
    %v109 = vld [vmem:[#allocation2 + $0xd8] sm:$0xff]
    %v110 = vld [vmem:[#allocation2 + $0xe0] sm:$0xff]
    %v111 = vld [vmem:[#allocation2 + $0xe8] sm:$0xff]
    %v112 = vld [vmem:[#allocation2 + $0xf0] sm:$0xff]
    %v113 = vld [vmem:[#allocation2 + $0xf8] sm:$0xff]
    %v114 = vld [vmem:[#allocation2 + $0x100] sm:$0xff]
    %v115 = vld [vmem:[#allocation2 + $0x108] sm:$0xff]
    %v116 = vld [vmem:[#allocation2 + $0x110] sm:$0xff]
    %v117 = vld [vmem:[#allocation2 + $0x118] sm:$0xff]
    %v118 = vld [vmem:[#allocation2 + $0x120] sm:$0xff]
    %v119 = vld [vmem:[#allocation2 + $0x128] sm:$0xff]
    %v120 = vld [vmem:[#allocation2 + $0x130] sm:$0xff]
    %v121 = vld [vmem:[#allocation2 + $0x138] sm:$0xff]
    %v122 = vld [vmem:[#allocation2 + $0x140] sm:$0xff]
    %v123 = vld [vmem:[#allocation2 + $0x148] sm:$0xff]
    %v124 = vld [vmem:[#allocation2 + $0x150] sm:$0xff]
    %v125 = vld [vmem:[#allocation2 + $0x158] sm:$0xff]
    %v126 = vld [vmem:[#allocation2 + $0x160] sm:$0xff]
    %v127 = vld [vmem:[#allocation2 + $0x168] sm:$0xff]
    %v128 = vld [vmem:[#allocation2 + $0x170] sm:$0xff]
    %v129 = vld [vmem:[#allocation2 + $0x178] sm:$0xff]
    %v130 = vld [vmem:[#allocation2 + $0x180] sm:$0xff]
    %v131 = vld [vmem:[#allocation2 + $0x188] sm:$0xff]
    %v132 = vld [vmem:[#allocation2 + $0x190] sm:$0xff]
    %v133 = vld [vmem:[#allocation2 + $0x198] sm:$0xff]
    %v134 = vld [vmem:[#allocation2 + $0x1a0] sm:$0xff]
    %v135 = vld [vmem:[#allocation2 + $0x1a8] sm:$0xff]
    %v136 = vld [vmem:[#allocation2 + $0x1b0] sm:$0xff]
    %v137 = vld [vmem:[#allocation2 + $0x1b8] sm:$0xff]
    %v138 = vld [vmem:[#allocation2 + $0x1c0] sm:$0xff]
    %v139 = vld [vmem:[#allocation2 + $0x1c8] sm:$0xff]
    %v140 = vld [vmem:[#allocation2 + $0x1d0] sm:$0xff]
    %v141 = vld [vmem:[#allocation2 + $0x1d8] sm:$0xff]
    %v142 = vld [vmem:[#allocation2 + $0x1e0] sm:$0xff]
    %v143 = vld [vmem:[#allocation2 + $0x1e8] sm:$0xff]
    %v144 = vld [vmem:[#allocation2 + $0x1f0] sm:$0xff]
    %v145 = vld [vmem:[#allocation2 + $0x1f8] sm:$0xff]
    %v146 = vld [vmem:[#allocation2 + $0x200] sm:$0xff]
    %v147 = vld [vmem:[#allocation2 + $0x208] sm:$0xff]
    %v148 = vld [vmem:[#allocation2 + $0x210] sm:$0xff]
    %v149 = vld [vmem:[#allocation2 + $0x218] sm:$0xff]
    %v150 = vld [vmem:[#allocation2 + $0x220] sm:$0xff]
    %v151 = vld [vmem:[#allocation2 + $0x228] sm:$0xff]
    %v152 = vld [vmem:[#allocation2 + $0x230] sm:$0xff]
    %v153 = vld [vmem:[#allocation2 + $0x238] sm:$0xff]
    %v154 = vld [vmem:[#allocation2 + $0x240] sm:$0xff]
    %v155 = vld [vmem:[#allocation2 + $0x248] sm:$0xff]
    %v156 = vld [vmem:[#allocation2 + $0x250] sm:$0xff]
    %v157 = vld [vmem:[#allocation2 + $0x258] sm:$0xff]
    %v158 = vld [vmem:[#allocation2 + $0x260] sm:$0xff]
    %v159 = vld [vmem:[#allocation2 + $0x268] sm:$0xff]
    %v160 = vld [vmem:[#allocation2 + $0x270] sm:$0xff]
    %v161 = vld [vmem:[#allocation2 + $0x278] sm:$0xff]
    %v162 = vld [vmem:[#allocation2 + $0x280] sm:$0xff]
    %v163 = vld [vmem:[#allocation2 + $0x288] sm:$0xff]
    %v164 = vld [vmem:[#allocation2 + $0x290] sm:$0xff]
    %v165 = vld [vmem:[#allocation2 + $0x298] sm:$0xff]
    %v166 = vld [vmem:[#allocation2 + $0x2a0] sm:$0xff]
    %v167 = vld [vmem:[#allocation2 + $0x2a8] sm:$0xff]
    %v168 = vld [vmem:[#allocation2 + $0x2b0] sm:$0xff]
    %v169 = vld [vmem:[#allocation2 + $0x2b8] sm:$0xff]
    %v170 = vld [vmem:[#allocation2 + $0x2c0] sm:$0xff]
    %v171 = vld [vmem:[#allocation2 + $0x2c8] sm:$0xff]
    %v172 = vld [vmem:[#allocation2 + $0x2d0] sm:$0xff]
    %v173 = vld [vmem:[#allocation2 + $0x2d8] sm:$0xff]
    %v174 = vld [vmem:[#allocation2 + $0x2e0] sm:$0xff]
    %v175 = vld [vmem:[#allocation2 + $0x2e8] sm:$0xff]
    %v176 = vld [vmem:[#allocation2 + $0x2f0] sm:$0xff]
    %v177 = vld [vmem:[#allocation2 + $0x2f8] sm:$0xff]
    %v178 = vld [vmem:[#allocation2 + $0x300] sm:$0xff]
    %v179 = vld [vmem:[#allocation2 + $0x308] sm:$0xff]
    %v180 = vld [vmem:[#allocation2 + $0x310] sm:$0xff]
    %v181 = vld [vmem:[#allocation2 + $0x318] sm:$0xff]
    %v182 = vld [vmem:[#allocation2 + $0x320] sm:$0xff]
    %v183 = vld [vmem:[#allocation2 + $0x328] sm:$0xff]
    %v184 = vld [vmem:[#allocation2 + $0x330] sm:$0xff]
    %v185 = vld [vmem:[#allocation2 + $0x338] sm:$0xff]
    %v186 = vld [vmem:[#allocation2 + $0x340] sm:$0xff]
    %v187 = vld [vmem:[#allocation2 + $0x348] sm:$0xff]
    %v188 = vld [vmem:[#allocation2 + $0x350] sm:$0xff]
    %v189 = vld [vmem:[#allocation2 + $0x358] sm:$0xff]
    %v190 = vld [vmem:[#allocation2 + $0x360] sm:$0xff]
    %v191 = vld [vmem:[#allocation2 + $0x368] sm:$0xff]
    %v192 = vld [vmem:[#allocation2 + $0x370] sm:$0xff]
    %v193 = vld [vmem:[#allocation2 + $0x378] sm:$0xff]
    %v194 = vld [vmem:[#allocation2 + $0x380] sm:$0xff]
    %v195 = vld [vmem:[#allocation2 + $0x388] sm:$0xff]
    %v196 = vld [vmem:[#allocation2 + $0x390] sm:$0xff]
    %v197 = vld [vmem:[#allocation2 + $0x398] sm:$0xff]
    %v198 = vld [vmem:[#allocation2 + $0x3a0] sm:$0xff]
    %v199 = vld [vmem:[#allocation2 + $0x3a8] sm:$0xff]
    %v200 = vld [vmem:[#allocation2 + $0x3b0] sm:$0xff]
    %v201 = vld [vmem:[#allocation2 + $0x3b8] sm:$0xff]
    %v202 = vld [vmem:[#allocation2 + $0x3c0] sm:$0xff]
    %v203 = vld [vmem:[#allocation2 + $0x3c8] sm:$0xff]
    %v204 = vld [vmem:[#allocation2 + $0x3d0] sm:$0xff]
    %v205 = vld [vmem:[#allocation2 + $0x3d8] sm:$0xff]
    %v206 = vld [vmem:[#allocation2 + $0x3e0] sm:$0xff]
    %v207 = vld [vmem:[#allocation2 + $0x3e8] sm:$0xff]
    %v208 = vld [vmem:[#allocation2 + $0x3f0] sm:$0xff]
    %v209 = vld [vmem:[#allocation2 + $0x3f8] sm:$0xff]
    %v210 = vld [vmem:[#allocation2 + $0x400] sm:$0xff]
    %v211 = vld [vmem:[#allocation2 + $0x408] sm:$0xff]
    %v212 = vld [vmem:[#allocation2 + $0x410] sm:$0xff]
    %v213 = vld [vmem:[#allocation2 + $0x418] sm:$0xff]
    %v214 = vld [vmem:[#allocation2 + $0x420] sm:$0xff]
    %v215 = vld [vmem:[#allocation2 + $0x428] sm:$0xff]
    %v216 = vld [vmem:[#allocation2 + $0x430] sm:$0xff]
    %v217 = vld [vmem:[#allocation2 + $0x438] sm:$0xff]
    %v218 = vld [vmem:[#allocation2 + $0x440] sm:$0xff]
    %v219 = vld [vmem:[#allocation2 + $0x448] sm:$0xff]
    %v220 = vld [vmem:[#allocation2 + $0x450] sm:$0xff]
    %v221 = vld [vmem:[#allocation2 + $0x458] sm:$0xff]
    %v222 = vld [vmem:[#allocation2 + $0x460] sm:$0xff]
    %v223 = vld [vmem:[#allocation2 + $0x468] sm:$0xff]
    %v224 = vld [vmem:[#allocation2 + $0x470] sm:$0xff]
    %v225 = vld [vmem:[#allocation2 + $0x478] sm:$0xff]
    %226 = vmatprep.subr.mxu0 0.0
    %227 = vmatpush1.msra.mxu0 %v49
    %228 = vmatprep.subr.mxu0 0.0
    %229 = vmatpush1.msra.mxu0 %v48
    %230 = vmatprep.subr.mxu0 0.0
    %231 = vmatpush1.msra.mxu0 %v47
    %232 = vmatprep.subr.mxu0 0.0
    %233 = vmatpush1.msra.mxu0 %v46
    %234 = vmatprep.subr.mxu0 0.0
    %235 = vmatpush1.msra.mxu0 %v45
    %236 = vmatprep.subr.mxu0 0.0
    %237 = vmatpush1.msra.mxu0 %v44
    %238 = vmatprep.subr.mxu0 0.0
    %239 = vmatpush1.msra.mxu0 %v43
    %240 = vmatprep.subr.mxu0 0.0
    %241 = vmatpush1.msra.mxu0 %v42
    %242 = vmatprep.subr.mxu0 0.0
    %243 = vmatpush1.msra.mxu0 %v41
    %244 = vmatprep.subr.mxu0 0.0
    %245 = vmatpush1.msra.mxu0 %v40
    %246 = vmatprep.subr.mxu0 0.0
    %247 = vmatpush1.msra.mxu0 %v39
    %248 = vmatprep.subr.mxu0 0.0
    %249 = vmatpush1.msra.mxu0 %v38
    %250 = vmatprep.subr.mxu0 0.0
    %251 = vmatpush1.msra.mxu0 %v37
    %252 = vmatprep.subr.mxu0 0.0
    %253 = vmatpush1.msra.mxu0 %v36
    %254 = vmatprep.subr.mxu0 0.0
    %255 = vmatpush1.msra.mxu0 %v35
    %256 = vmatprep.subr.mxu0 0.0
    %257 = vmatpush1.msra.mxu0 %v34
    %258 = vmatprep.subr.mxu0 0.0
    %259 = vmatpush2.msra.mxu0 %v65
    %260 = vmatprep.subr.mxu0 0.0
    %261 = vmatpush2.msra.mxu0 %v64
    %262 = vmatprep.subr.mxu0 0.0
    %263 = vmatpush2.msra.mxu0 %v63
    %264 = vmatprep.subr.mxu0 0.0
    %265 = vmatpush2.msra.mxu0 %v62
    %266 = vmatprep.subr.mxu0 0.0
    %267 = vmatpush2.msra.mxu0 %v61
    %268 = vmatprep.subr.mxu0 0.0
    %269 = vmatpush2.msra.mxu0 %v60
    %270 = vmatprep.subr.mxu0 0.0
    %271 = vmatpush2.msra.mxu0 %v59
    %272 = vmatprep.subr.mxu0 0.0
    %273 = vmatpush2.msra.mxu0 %v58
    %274 = vmatprep.subr.mxu0 0.0
    %275 = vmatpush2.msra.mxu0 %v57
    %276 = vmatprep.subr.mxu0 0.0
    %277 = vmatpush2.msra.mxu0 %v56
    %278 = vmatprep.subr.mxu0 0.0
    %279 = vmatpush2.msra.mxu0 %v55
    %280 = vmatprep.subr.mxu0 0.0
    %281 = vmatpush2.msra.mxu0 %v54
    %282 = vmatprep.subr.mxu0 0.0
    %283 = vmatpush2.msra.mxu0 %v53
    %284 = vmatprep.subr.mxu0 0.0
    %285 = vmatpush2.msra.mxu0 %v52
    %286 = vmatprep.subr.mxu0 0.0
    %287 = vmatpush2.msra.mxu0 %v51
    %288 = vmatprep.subr.mxu0 0.0
    %289 = vmatpush2.msra.mxu0 %v50
    %290 = vmatprep.mubr.f32.mxu0 %v83
    %291 = vmatmul.mubr.f32.gmra.mxu0 %v82
    %v292 = vpop.f32.mrf.mxu0
    %v293 = vadd.f32 0.0, %v292
    %v294 = vpop.f32.mrf.mxu0
    %295 = vmatprep.mubr.f32.mxu0 %v86
    %296 = vmatmul.mubr.f32.gmra.mxu0 %v85
    %v297 = vpop.f32.mrf.mxu0
    %v298 = vadd.f32 0.0, %v297
    %v299 = vpop.f32.mrf.mxu0
    %300 = vmatprep.mubr.f32.mxu0 %v89
    %301 = vmatmul.mubr.f32.gmra.mxu0 %v88
    %v302 = vpop.f32.mrf.mxu0
    %v303 = vadd.f32 0.0, %v302
    %v304 = vpop.f32.mrf.mxu0
    %305 = vmatprep.mubr.f32.mxu0 %v92
    %306 = vmatmul.mubr.f32.gmra.mxu0 %v91
    %v307 = vpop.f32.mrf.mxu0
    %v308 = vadd.f32 0.0, %v307
    %v309 = vpop.f32.mrf.mxu0
    %310 = vmatprep.mubr.f32.mxu0 %v95
    %311 = vmatmul.mubr.f32.gmra.mxu0 %v94
    %v312 = vpop.f32.mrf.mxu0
    %v313 = vadd.f32 0.0, %v312
    %v314 = vpop.f32.mrf.mxu0
    %315 = vmatprep.mubr.f32.mxu0 %v98
    %316 = vmatmul.mubr.f32.gmra.mxu0 %v97
    %v317 = vpop.f32.mrf.mxu0
    %v318 = vadd.f32 0.0, %v317
    %v319 = vpop.f32.mrf.mxu0
    %320 = vmatprep.mubr.f32.mxu0 %v101
    %321 = vmatmul.mubr.f32.gmra.mxu0 %v100
    %v322 = vpop.f32.mrf.mxu0
    %v323 = vadd.f32 0.0, %v322
    %v324 = vpop.f32.mrf.mxu0
    %325 = vmatprep.mubr.f32.mxu0 %v104
    %326 = vmatmul.mubr.f32.gmra.mxu0 %v103
    %v327 = vpop.f32.mrf.mxu0
    %v328 = vadd.f32 0.0, %v327
    %v329 = vpop.f32.mrf.mxu0
    %330 = vmatprep.mubr.f32.mxu0 %v107
    %331 = vmatmul.mubr.f32.gmra.mxu0 %v106
    %v332 = vpop.f32.mrf.mxu0
    %v333 = vadd.f32 0.0, %v332
    %v334 = vpop.f32.mrf.mxu0
    %335 = vmatprep.mubr.f32.mxu0 %v110
    %336 = vmatmul.mubr.f32.gmra.mxu0 %v109
    %v337 = vpop.f32.mrf.mxu0
    %v338 = vadd.f32 0.0, %v337
    %v339 = vpop.f32.mrf.mxu0
    %340 = vmatprep.mubr.f32.mxu0 %v113
    %341 = vmatmul.mubr.f32.gmra.mxu0 %v112
    %v342 = vpop.f32.mrf.mxu0
    %v343 = vadd.f32 0.0, %v342
    %v344 = vpop.f32.mrf.mxu0
    %345 = vmatprep.mubr.f32.mxu0 %v116
    %346 = vmatmul.mubr.f32.gmra.mxu0 %v115
    %v347 = vpop.f32.mrf.mxu0
    %v348 = vadd.f32 0.0, %v347
    %v349 = vpop.f32.mrf.mxu0
    %350 = vmatprep.mubr.f32.mxu0 %v119
    %351 = vmatmul.mubr.f32.gmra.mxu0 %v118
    %v352 = vpop.f32.mrf.mxu0
    %v353 = vadd.f32 0.0, %v352
    %v354 = vpop.f32.mrf.mxu0
    %355 = vmatprep.mubr.f32.mxu0 %v122
    %356 = vmatmul.mubr.f32.gmra.mxu0 %v121
    %v357 = vpop.f32.mrf.mxu0
    %v358 = vadd.f32 0.0, %v357
    %v359 = vpop.f32.mrf.mxu0
    %360 = vmatprep.mubr.f32.mxu0 %v125
    %361 = vmatmul.mubr.f32.gmra.mxu0 %v124
    %v362 = vpop.f32.mrf.mxu0
    %v363 = vadd.f32 0.0, %v362
    %v364 = vpop.f32.mrf.mxu0
    %365 = vmatprep.mubr.f32.mxu0 %v128
    %366 = vmatmul.mubr.f32.gmra.mxu0 %v127
    %v367 = vpop.f32.mrf.mxu0
    %v368 = vadd.f32 0.0, %v367
    %v369 = vpop.f32.mrf.mxu0
    %370 = vmatprep.mubr.f32.mxu0 %v131
    %371 = vmatmul.mubr.f32.gmra.mxu0 %v130
    %v372 = vpop.f32.mrf.mxu0
    %v373 = vadd.f32 0.0, %v372
    %v374 = vpop.f32.mrf.mxu0
    %375 = vmatprep.mubr.f32.mxu0 %v134
    %376 = vmatmul.mubr.f32.gmra.mxu0 %v133
    %v377 = vpop.f32.mrf.mxu0
    %v378 = vadd.f32 0.0, %v377
    %v379 = vpop.f32.mrf.mxu0
    %380 = vmatprep.mubr.f32.mxu0 %v137
    %381 = vmatmul.mubr.f32.gmra.mxu0 %v136
    %v382 = vpop.f32.mrf.mxu0
    %v383 = vadd.f32 0.0, %v382
    %v384 = vpop.f32.mrf.mxu0
    %385 = vmatprep.mubr.f32.mxu0 %v140
    %386 = vmatmul.mubr.f32.gmra.mxu0 %v139
    %v387 = vpop.f32.mrf.mxu0
    %v388 = vadd.f32 0.0, %v387
    %v389 = vpop.f32.mrf.mxu0
    %390 = vmatprep.mubr.f32.mxu0 %v143
    %391 = vmatmul.mubr.f32.gmra.mxu0 %v142
    %v392 = vpop.f32.mrf.mxu0
    %v393 = vadd.f32 0.0, %v392
    %v394 = vpop.f32.mrf.mxu0
    %395 = vmatprep.mubr.f32.mxu0 %v146
    %396 = vmatmul.mubr.f32.gmra.mxu0 %v145
    %v397 = vpop.f32.mrf.mxu0
    %v398 = vadd.f32 0.0, %v397
    %v399 = vpop.f32.mrf.mxu0
    %400 = vmatprep.mubr.f32.mxu0 %v149
    %401 = vmatmul.mubr.f32.gmra.mxu0 %v148
    %v402 = vpop.f32.mrf.mxu0
    %v403 = vadd.f32 0.0, %v402
    %v404 = vpop.f32.mrf.mxu0
    %405 = vmatprep.mubr.f32.mxu0 %v152
    %406 = vmatmul.mubr.f32.gmra.mxu0 %v151
    %v407 = vpop.f32.mrf.mxu0
    %v408 = vadd.f32 0.0, %v407
    %v409 = vpop.f32.mrf.mxu0
    %410 = vmatprep.mubr.f32.mxu0 %v155
    %411 = vmatmul.mubr.f32.gmra.mxu0 %v154
    %v412 = vpop.f32.mrf.mxu0
    %v413 = vadd.f32 0.0, %v412
    %v414 = vpop.f32.mrf.mxu0
    %415 = vmatprep.mubr.f32.mxu0 %v158
    %416 = vmatmul.mubr.f32.gmra.mxu0 %v157
    %v417 = vpop.f32.mrf.mxu0
    %v418 = vadd.f32 0.0, %v417
    %v419 = vpop.f32.mrf.mxu0
    %420 = vmatprep.mubr.f32.mxu0 %v161
    %421 = vmatmul.mubr.f32.gmra.mxu0 %v160
    %v422 = vpop.f32.mrf.mxu0
    %v423 = vadd.f32 0.0, %v422
    %v424 = vpop.f32.mrf.mxu0
    %425 = vmatprep.mubr.f32.mxu0 %v164
    %426 = vmatmul.mubr.f32.gmra.mxu0 %v163
    %v427 = vpop.f32.mrf.mxu0
    %v428 = vadd.f32 0.0, %v427
    %v429 = vpop.f32.mrf.mxu0
    %430 = vmatprep.mubr.f32.mxu0 %v167
    %431 = vmatmul.mubr.f32.gmra.mxu0 %v166
    %v432 = vpop.f32.mrf.mxu0
    %v433 = vadd.f32 0.0, %v432
    %v434 = vpop.f32.mrf.mxu0
    %435 = vmatprep.mubr.f32.mxu0 %v170
    %436 = vmatmul.mubr.f32.gmra.mxu0 %v169
    %v437 = vpop.f32.mrf.mxu0
    %v438 = vadd.f32 0.0, %v437
    %v439 = vpop.f32.mrf.mxu0
    %440 = vmatprep.mubr.f32.mxu0 %v173
    %441 = vmatmul.mubr.f32.gmra.mxu0 %v172
    %v442 = vpop.f32.mrf.mxu0
    %v443 = vadd.f32 0.0, %v442
    %v444 = vpop.f32.mrf.mxu0
    %445 = vmatprep.mubr.f32.mxu0 %v176
    %446 = vmatmul.mubr.f32.gmra.mxu0 %v175
    %v447 = vpop.f32.mrf.mxu0
    %v448 = vadd.f32 0.0, %v447
    %v449 = vpop.f32.mrf.mxu0
    %450 = vmatprep.mubr.f32.mxu0 %v179
    %451 = vmatmul.mubr.f32.gmra.mxu0 %v178
    %v452 = vpop.f32.mrf.mxu0
    %v453 = vadd.f32 0.0, %v452
    %v454 = vpop.f32.mrf.mxu0
    %455 = vmatprep.mubr.f32.mxu0 %v182
    %456 = vmatmul.mubr.f32.gmra.mxu0 %v181
    %v457 = vpop.f32.mrf.mxu0
    %v458 = vadd.f32 0.0, %v457
    %v459 = vpop.f32.mrf.mxu0
    %460 = vmatprep.mubr.f32.mxu0 %v185
    %461 = vmatmul.mubr.f32.gmra.mxu0 %v184
    %v462 = vpop.f32.mrf.mxu0
    %v463 = vadd.f32 0.0, %v462
    %v464 = vpop.f32.mrf.mxu0
    %465 = vmatprep.mubr.f32.mxu0 %v188
    %466 = vmatmul.mubr.f32.gmra.mxu0 %v187
    %v467 = vpop.f32.mrf.mxu0
    %v468 = vadd.f32 0.0, %v467
    %v469 = vpop.f32.mrf.mxu0
    %470 = vmatprep.mubr.f32.mxu0 %v191
    %471 = vmatmul.mubr.f32.gmra.mxu0 %v190
    %v472 = vpop.f32.mrf.mxu0
    %v473 = vadd.f32 0.0, %v472
    %v474 = vpop.f32.mrf.mxu0
    %475 = vmatprep.mubr.f32.mxu0 %v194
    %476 = vmatmul.mubr.f32.gmra.mxu0 %v193
    %v477 = vpop.f32.mrf.mxu0
    %v478 = vadd.f32 0.0, %v477
    %v479 = vpop.f32.mrf.mxu0
    %480 = vmatprep.mubr.f32.mxu0 %v197
    %481 = vmatmul.mubr.f32.gmra.mxu0 %v196
    %v482 = vpop.f32.mrf.mxu0
    %v483 = vadd.f32 0.0, %v482
    %v484 = vpop.f32.mrf.mxu0
    %485 = vmatprep.mubr.f32.mxu0 %v200
    %486 = vmatmul.mubr.f32.gmra.mxu0 %v199
    %v487 = vpop.f32.mrf.mxu0
    %v488 = vadd.f32 0.0, %v487
    %v489 = vpop.f32.mrf.mxu0
    %490 = vmatprep.mubr.f32.mxu0 %v203
    %491 = vmatmul.mubr.f32.gmra.mxu0 %v202
    %v492 = vpop.f32.mrf.mxu0
    %v493 = vadd.f32 0.0, %v492
    %v494 = vpop.f32.mrf.mxu0
    %495 = vmatprep.mubr.f32.mxu0 %v206
    %496 = vmatmul.mubr.f32.gmra.mxu0 %v205
    %v497 = vpop.f32.mrf.mxu0
    %v498 = vadd.f32 0.0, %v497
    %v499 = vpop.f32.mrf.mxu0
    %500 = vmatprep.mubr.f32.mxu0 %v209
    %501 = vmatmul.mubr.f32.gmra.mxu0 %v208
    %v502 = vpop.f32.mrf.mxu0
    %v503 = vadd.f32 0.0, %v502
    %v504 = vpop.f32.mrf.mxu0
    %505 = vmatprep.mubr.f32.mxu0 %v212
    %506 = vmatmul.mubr.f32.gmra.mxu0 %v211
    %v507 = vpop.f32.mrf.mxu0
    %v508 = vadd.f32 0.0, %v507
    %v509 = vpop.f32.mrf.mxu0
    %510 = vmatprep.mubr.f32.mxu0 %v215
    %511 = vmatmul.mubr.f32.gmra.mxu0 %v214
    %v512 = vpop.f32.mrf.mxu0
    %v513 = vadd.f32 0.0, %v512
    %v514 = vpop.f32.mrf.mxu0
    %515 = vmatprep.mubr.f32.mxu0 %v218
    %516 = vmatmul.mubr.f32.gmra.mxu0 %v217
    %v517 = vpop.f32.mrf.mxu0
    %v518 = vadd.f32 0.0, %v517
    %v519 = vpop.f32.mrf.mxu0
    %520 = vmatprep.mubr.f32.mxu0 %v221
    %521 = vmatmul.mubr.f32.gmra.mxu0 %v220
    %v522 = vpop.f32.mrf.mxu0
    %v523 = vadd.f32 0.0, %v522
    %v524 = vpop.f32.mrf.mxu0
    %525 = vmatprep.mubr.f32.mxu0 %v224
    %526 = vmatmul.mubr.f32.gmra.mxu0 %v223
    %v527 = vpop.f32.mrf.mxu0
    %v528 = vadd.f32 0.0, %v527
    %v529 = vpop.f32.mrf.mxu0
    %530 = vdwg.mxu0
    %531 = vmatprep.subr.mxu0 0.0
    %532 = vmatpush1.msra.mxu0 %v81
    %533 = vmatprep.subr.mxu0 0.0
    %534 = vmatpush1.msra.mxu0 %v80
    %535 = vmatprep.subr.mxu0 0.0
    %536 = vmatpush1.msra.mxu0 %v79
    %537 = vmatprep.subr.mxu0 0.0
    %538 = vmatpush1.msra.mxu0 %v78
    %539 = vmatprep.subr.mxu0 0.0
    %540 = vmatpush1.msra.mxu0 %v77
    %541 = vmatprep.subr.mxu0 0.0
    %542 = vmatpush1.msra.mxu0 %v76
    %543 = vmatprep.subr.mxu0 0.0
    %544 = vmatpush1.msra.mxu0 %v75
    %545 = vmatprep.subr.mxu0 0.0
    %546 = vmatpush1.msra.mxu0 %v74
    %547 = vmatprep.subr.mxu0 0.0
    %548 = vmatpush1.msra.mxu0 %v73
    %549 = vmatprep.subr.mxu0 0.0
    %550 = vmatpush1.msra.mxu0 %v72
    %551 = vmatprep.subr.mxu0 0.0
    %552 = vmatpush1.msra.mxu0 %v71
    %553 = vmatprep.subr.mxu0 0.0
    %554 = vmatpush1.msra.mxu0 %v70
    %555 = vmatprep.subr.mxu0 0.0
    %556 = vmatpush1.msra.mxu0 %v69
    %557 = vmatprep.subr.mxu0 0.0
    %558 = vmatpush1.msra.mxu0 %v68
    %559 = vmatprep.subr.mxu0 0.0
    %560 = vmatpush1.msra.mxu0 %v67
    %561 = vmatprep.subr.mxu0 0.0
    %562 = vmatpush1.msra.mxu0 %v66
    %563 = vmatprep.subr.mxu0 0.0
    %564 = vmatpush2.msra.mxu0 0.0
    %565 = vmatprep.subr.mxu0 0.0
    %566 = vmatpush2.msra.mxu0 0.0
    %567 = vmatprep.subr.mxu0 0.0
    %568 = vmatpush2.msra.mxu0 0.0
    %569 = vmatprep.subr.mxu0 0.0
    %570 = vmatpush2.msra.mxu0 0.0
    %571 = vmatprep.subr.mxu0 0.0
    %572 = vmatpush2.msra.mxu0 0.0
    %573 = vmatprep.subr.mxu0 0.0
    %574 = vmatpush2.msra.mxu0 0.0
    %575 = vmatprep.subr.mxu0 0.0
    %576 = vmatpush2.msra.mxu0 0.0
    %577 = vmatprep.subr.mxu0 0.0
    %578 = vmatpush2.msra.mxu0 0.0
    %579 = vmatprep.subr.mxu0 0.0
    %580 = vmatpush2.msra.mxu0 0.0
    %581 = vmatprep.subr.mxu0 0.0
    %582 = vmatpush2.msra.mxu0 0.0
    %583 = vmatprep.subr.mxu0 0.0
    %584 = vmatpush2.msra.mxu0 0.0
    %585 = vmatprep.subr.mxu0 0.0
    %586 = vmatpush2.msra.mxu0 0.0
    %587 = vmatprep.subr.mxu0 0.0
    %588 = vmatpush2.msra.mxu0 0.0
    %589 = vmatprep.subr.mxu0 0.0
    %590 = vmatpush2.msra.mxu0 0.0
    %591 = vmatprep.subr.mxu0 0.0
    %592 = vmatpush2.msra.mxu0 0.0
    %593 = vmatprep.subr.mxu0 0.0
    %594 = vmatpush2.msra.mxu0 0.0
    %595 = vmatprep.mubr.f32.mxu0 0.0
    %596 = vmatmul.mubr.f32.gmra.mxu0 %v84
    %v597 = vpop.f32.mrf.mxu0
    %v598 = vadd.f32 %v293, %v597
    %v599 = vpop.f32.mrf.mxu0
    %600 = vmatprep.mubr.f32.mxu0 0.0
    %601 = vmatmul.mubr.f32.gmra.mxu0 %v87
    %v602 = vpop.f32.mrf.mxu0
    %v603 = vadd.f32 %v298, %v602
    %v604 = vpop.f32.mrf.mxu0
    %605 = vmatprep.mubr.f32.mxu0 0.0
    %606 = vmatmul.mubr.f32.gmra.mxu0 %v90
    %v607 = vpop.f32.mrf.mxu0
    %v608 = vadd.f32 %v303, %v607
    %v609 = vpop.f32.mrf.mxu0
    %610 = vmatprep.mubr.f32.mxu0 0.0
    %611 = vmatmul.mubr.f32.gmra.mxu0 %v93
    %v612 = vpop.f32.mrf.mxu0
    %v613 = vadd.f32 %v308, %v612
    %v614 = vpop.f32.mrf.mxu0
    %615 = vmatprep.mubr.f32.mxu0 0.0
    %616 = vmatmul.mubr.f32.gmra.mxu0 %v96
    %v617 = vpop.f32.mrf.mxu0
    %v618 = vadd.f32 %v313, %v617
    %v619 = vpop.f32.mrf.mxu0
    %620 = vmatprep.mubr.f32.mxu0 0.0
    %621 = vmatmul.mubr.f32.gmra.mxu0 %v99
    %v622 = vpop.f32.mrf.mxu0
    %v623 = vadd.f32 %v318, %v622
    %v624 = vpop.f32.mrf.mxu0
    %625 = vmatprep.mubr.f32.mxu0 0.0
    %626 = vmatmul.mubr.f32.gmra.mxu0 %v102
    %v627 = vpop.f32.mrf.mxu0
    %v628 = vadd.f32 %v323, %v627
    %v629 = vpop.f32.mrf.mxu0
    %630 = vmatprep.mubr.f32.mxu0 0.0
    %631 = vmatmul.mubr.f32.gmra.mxu0 %v105
    %v632 = vpop.f32.mrf.mxu0
    %v633 = vadd.f32 %v328, %v632
    %v634 = vpop.f32.mrf.mxu0
    %635 = vmatprep.mubr.f32.mxu0 0.0
    %636 = vmatmul.mubr.f32.gmra.mxu0 %v108
    %v637 = vpop.f32.mrf.mxu0
    %v638 = vadd.f32 %v333, %v637
    %v639 = vpop.f32.mrf.mxu0
    %640 = vmatprep.mubr.f32.mxu0 0.0
    %641 = vmatmul.mubr.f32.gmra.mxu0 %v111
    %v642 = vpop.f32.mrf.mxu0
    %v643 = vadd.f32 %v338, %v642
    %v644 = vpop.f32.mrf.mxu0
    %645 = vmatprep.mubr.f32.mxu0 0.0
    %646 = vmatmul.mubr.f32.gmra.mxu0 %v114
    %v647 = vpop.f32.mrf.mxu0
    %v648 = vadd.f32 %v343, %v647
    %v649 = vpop.f32.mrf.mxu0
    %650 = vmatprep.mubr.f32.mxu0 0.0
    %651 = vmatmul.mubr.f32.gmra.mxu0 %v117
    %v652 = vpop.f32.mrf.mxu0
    %v653 = vadd.f32 %v348, %v652
    %v654 = vpop.f32.mrf.mxu0
    %655 = vmatprep.mubr.f32.mxu0 0.0
    %656 = vmatmul.mubr.f32.gmra.mxu0 %v120
    %v657 = vpop.f32.mrf.mxu0
    %v658 = vadd.f32 %v353, %v657
    %v659 = vpop.f32.mrf.mxu0
    %660 = vmatprep.mubr.f32.mxu0 0.0
    %661 = vmatmul.mubr.f32.gmra.mxu0 %v123
    %v662 = vpop.f32.mrf.mxu0
    %v663 = vadd.f32 %v358, %v662
    %v664 = vpop.f32.mrf.mxu0
    %665 = vmatprep.mubr.f32.mxu0 0.0
    %666 = vmatmul.mubr.f32.gmra.mxu0 %v126
    %v667 = vpop.f32.mrf.mxu0
    %v668 = vadd.f32 %v363, %v667
    %v669 = vpop.f32.mrf.mxu0
    %670 = vmatprep.mubr.f32.mxu0 0.0
    %671 = vmatmul.mubr.f32.gmra.mxu0 %v129
    %v672 = vpop.f32.mrf.mxu0
    %v673 = vadd.f32 %v368, %v672
    %v674 = vpop.f32.mrf.mxu0
    %675 = vmatprep.mubr.f32.mxu0 0.0
    %676 = vmatmul.mubr.f32.gmra.mxu0 %v132
    %v677 = vpop.f32.mrf.mxu0
    %v678 = vadd.f32 %v373, %v677
    %v679 = vpop.f32.mrf.mxu0
    %680 = vmatprep.mubr.f32.mxu0 0.0
    %681 = vmatmul.mubr.f32.gmra.mxu0 %v135
    %v682 = vpop.f32.mrf.mxu0
    %v683 = vadd.f32 %v378, %v682
    %v684 = vpop.f32.mrf.mxu0
    %685 = vmatprep.mubr.f32.mxu0 0.0
    %686 = vmatmul.mubr.f32.gmra.mxu0 %v138
    %v687 = vpop.f32.mrf.mxu0
    %v688 = vadd.f32 %v383, %v687
    %v689 = vpop.f32.mrf.mxu0
    %690 = vmatprep.mubr.f32.mxu0 0.0
    %691 = vmatmul.mubr.f32.gmra.mxu0 %v141
    %v692 = vpop.f32.mrf.mxu0
    %v693 = vadd.f32 %v388, %v692
    %v694 = vpop.f32.mrf.mxu0
    %695 = vmatprep.mubr.f32.mxu0 0.0
    %696 = vmatmul.mubr.f32.gmra.mxu0 %v144
    %v697 = vpop.f32.mrf.mxu0
    %v698 = vadd.f32 %v393, %v697
    %v699 = vpop.f32.mrf.mxu0
    %700 = vmatprep.mubr.f32.mxu0 0.0
    %701 = vmatmul.mubr.f32.gmra.mxu0 %v147
    %v702 = vpop.f32.mrf.mxu0
    %v703 = vadd.f32 %v398, %v702
    %v704 = vpop.f32.mrf.mxu0
    %705 = vmatprep.mubr.f32.mxu0 0.0
    %706 = vmatmul.mubr.f32.gmra.mxu0 %v150
    %v707 = vpop.f32.mrf.mxu0
    %v708 = vadd.f32 %v403, %v707
    %v709 = vpop.f32.mrf.mxu0
    %710 = vmatprep.mubr.f32.mxu0 0.0
    %711 = vmatmul.mubr.f32.gmra.mxu0 %v153
    %v712 = vpop.f32.mrf.mxu0
    %v713 = vadd.f32 %v408, %v712
    %v714 = vpop.f32.mrf.mxu0
    %715 = vmatprep.mubr.f32.mxu0 0.0
    %716 = vmatmul.mubr.f32.gmra.mxu0 %v156
    %v717 = vpop.f32.mrf.mxu0
    %v718 = vadd.f32 %v413, %v717
    %v719 = vpop.f32.mrf.mxu0
    %720 = vmatprep.mubr.f32.mxu0 0.0
    %721 = vmatmul.mubr.f32.gmra.mxu0 %v159
    %v722 = vpop.f32.mrf.mxu0
    %v723 = vadd.f32 %v418, %v722
    %v724 = vpop.f32.mrf.mxu0
    %725 = vmatprep.mubr.f32.mxu0 0.0
    %726 = vmatmul.mubr.f32.gmra.mxu0 %v162
    %v727 = vpop.f32.mrf.mxu0
    %v728 = vadd.f32 %v423, %v727
    %v729 = vpop.f32.mrf.mxu0
    %730 = vmatprep.mubr.f32.mxu0 0.0
    %731 = vmatmul.mubr.f32.gmra.mxu0 %v165
    %v732 = vpop.f32.mrf.mxu0
    %v733 = vadd.f32 %v428, %v732
    %v734 = vpop.f32.mrf.mxu0
    %735 = vmatprep.mubr.f32.mxu0 0.0
    %736 = vmatmul.mubr.f32.gmra.mxu0 %v168
    %v737 = vpop.f32.mrf.mxu0
    %v738 = vadd.f32 %v433, %v737
    %v739 = vpop.f32.mrf.mxu0
    %740 = vmatprep.mubr.f32.mxu0 0.0
    %741 = vmatmul.mubr.f32.gmra.mxu0 %v171
    %v742 = vpop.f32.mrf.mxu0
    %v743 = vadd.f32 %v438, %v742
    %v744 = vpop.f32.mrf.mxu0
    %745 = vmatprep.mubr.f32.mxu0 0.0
    %746 = vmatmul.mubr.f32.gmra.mxu0 %v174
    %v747 = vpop.f32.mrf.mxu0
    %v748 = vadd.f32 %v443, %v747
    %v749 = vpop.f32.mrf.mxu0
    %750 = vmatprep.mubr.f32.mxu0 0.0
    %751 = vmatmul.mubr.f32.gmra.mxu0 %v177
    %v752 = vpop.f32.mrf.mxu0
    %v753 = vadd.f32 %v448, %v752
    %v754 = vpop.f32.mrf.mxu0
    %755 = vmatprep.mubr.f32.mxu0 0.0
    %756 = vmatmul.mubr.f32.gmra.mxu0 %v180
    %v757 = vpop.f32.mrf.mxu0
    %v758 = vadd.f32 %v453, %v757
    %v759 = vpop.f32.mrf.mxu0
    %760 = vmatprep.mubr.f32.mxu0 0.0
    %761 = vmatmul.mubr.f32.gmra.mxu0 %v183
    %v762 = vpop.f32.mrf.mxu0
    %v763 = vadd.f32 %v458, %v762
    %v764 = vpop.f32.mrf.mxu0
    %765 = vmatprep.mubr.f32.mxu0 0.0
    %766 = vmatmul.mubr.f32.gmra.mxu0 %v186
    %v767 = vpop.f32.mrf.mxu0
    %v768 = vadd.f32 %v463, %v767
    %v769 = vpop.f32.mrf.mxu0
    %770 = vmatprep.mubr.f32.mxu0 0.0
    %771 = vmatmul.mubr.f32.gmra.mxu0 %v189
    %v772 = vpop.f32.mrf.mxu0
    %v773 = vadd.f32 %v468, %v772
    %v774 = vpop.f32.mrf.mxu0
    %775 = vmatprep.mubr.f32.mxu0 0.0
    %776 = vmatmul.mubr.f32.gmra.mxu0 %v192
    %v777 = vpop.f32.mrf.mxu0
    %v778 = vadd.f32 %v473, %v777
    %v779 = vpop.f32.mrf.mxu0
    %780 = vmatprep.mubr.f32.mxu0 0.0
    %781 = vmatmul.mubr.f32.gmra.mxu0 %v195
    %v782 = vpop.f32.mrf.mxu0
    %v783 = vadd.f32 %v478, %v782
    %v784 = vpop.f32.mrf.mxu0
    %785 = vmatprep.mubr.f32.mxu0 0.0
    %786 = vmatmul.mubr.f32.gmra.mxu0 %v198
    %v787 = vpop.f32.mrf.mxu0
    %v788 = vadd.f32 %v483, %v787
    %v789 = vpop.f32.mrf.mxu0
    %790 = vmatprep.mubr.f32.mxu0 0.0
    %791 = vmatmul.mubr.f32.gmra.mxu0 %v201
    %v792 = vpop.f32.mrf.mxu0
    %v793 = vadd.f32 %v488, %v792
    %v794 = vpop.f32.mrf.mxu0
    %795 = vmatprep.mubr.f32.mxu0 0.0
    %796 = vmatmul.mubr.f32.gmra.mxu0 %v204
    %v797 = vpop.f32.mrf.mxu0
    %v798 = vadd.f32 %v493, %v797
    %v799 = vpop.f32.mrf.mxu0
    %800 = vmatprep.mubr.f32.mxu0 0.0
    %801 = vmatmul.mubr.f32.gmra.mxu0 %v207
    %v802 = vpop.f32.mrf.mxu0
    %v803 = vadd.f32 %v498, %v802
    %v804 = vpop.f32.mrf.mxu0
    %805 = vmatprep.mubr.f32.mxu0 0.0
    %806 = vmatmul.mubr.f32.gmra.mxu0 %v210
    %v807 = vpop.f32.mrf.mxu0
    %v808 = vadd.f32 %v503, %v807
    %v809 = vpop.f32.mrf.mxu0
    %810 = vmatprep.mubr.f32.mxu0 0.0
    %811 = vmatmul.mubr.f32.gmra.mxu0 %v213
    %v812 = vpop.f32.mrf.mxu0
    %v813 = vadd.f32 %v508, %v812
    %v814 = vpop.f32.mrf.mxu0
    %815 = vmatprep.mubr.f32.mxu0 0.0
    %816 = vmatmul.mubr.f32.gmra.mxu0 %v216
    %v817 = vpop.f32.mrf.mxu0
    %v818 = vadd.f32 %v513, %v817
    %v819 = vpop.f32.mrf.mxu0
    %820 = vmatprep.mubr.f32.mxu0 0.0
    %821 = vmatmul.mubr.f32.gmra.mxu0 %v219
    %v822 = vpop.f32.mrf.mxu0
    %v823 = vadd.f32 %v518, %v822
    %v824 = vpop.f32.mrf.mxu0
    %825 = vmatprep.mubr.f32.mxu0 0.0
    %826 = vmatmul.mubr.f32.gmra.mxu0 %v222
    %v827 = vpop.f32.mrf.mxu0
    %v828 = vadd.f32 %v523, %v827
    %v829 = vpop.f32.mrf.mxu0
    %830 = vmatprep.mubr.f32.mxu0 0.0
    %831 = vmatmul.mubr.f32.gmra.mxu0 %v225
    %v832 = vpop.f32.mrf.mxu0
    %v833 = vadd.f32 %v528, %v832
    %v834 = vpop.f32.mrf.mxu0
    %835 = vdwg.mxu0
    %vm836 = vcmask 15360
    %837 = vst.msk [vmem:[%s4] sm:$0xff] %vm836, %v598
    %838 = vst.msk [vmem:[%s4 + $0x8] sm:$0xff] %vm836, %v603
    %839 = vst.msk [vmem:[%s4 + $0x10] sm:$0xff] %vm836, %v608
    %840 = vst.msk [vmem:[%s4 + $0x18] sm:$0xff] %vm836, %v613
    %841 = vst.msk [vmem:[%s4 + $0x20] sm:$0xff] %vm836, %v618
    %842 = vst.msk [vmem:[%s4 + $0x28] sm:$0xff] %vm836, %v623
    %843 = vst.msk [vmem:[%s4 + $0x30] sm:$0xff] %vm836, %v628
    %844 = vst.msk [vmem:[%s4 + $0x38] sm:$0xff] %vm836, %v633
    %845 = vst.msk [vmem:[%s4 + $0x40] sm:$0xff] %vm836, %v638
    %846 = vst.msk [vmem:[%s4 + $0x48] sm:$0xff] %vm836, %v643
    %847 = vst.msk [vmem:[%s4 + $0x50] sm:$0xff] %vm836, %v648
    %848 = vst.msk [vmem:[%s4 + $0x58] sm:$0xff] %vm836, %v653
    %849 = vst.msk [vmem:[%s4 + $0x60] sm:$0xff] %vm836, %v658
    %850 = vst.msk [vmem:[%s4 + $0x68] sm:$0xff] %vm836, %v663
    %851 = vst.msk [vmem:[%s4 + $0x70] sm:$0xff] %vm836, %v668
    %852 = vst.msk [vmem:[%s4 + $0x78] sm:$0xff] %vm836, %v673
    %853 = vst.msk [vmem:[%s4 + $0x80] sm:$0xff] %vm836, %v678
    %854 = vst.msk [vmem:[%s4 + $0x88] sm:$0xff] %vm836, %v683
    %855 = vst.msk [vmem:[%s4 + $0x90] sm:$0xff] %vm836, %v688
    %856 = vst.msk [vmem:[%s4 + $0x98] sm:$0xff] %vm836, %v693
    %857 = vst.msk [vmem:[%s4 + $0xa0] sm:$0xff] %vm836, %v698
    %858 = vst.msk [vmem:[%s4 + $0xa8] sm:$0xff] %vm836, %v703
    %859 = vst.msk [vmem:[%s4 + $0xb0] sm:$0xff] %vm836, %v708
    %860 = vst.msk [vmem:[%s4 + $0xb8] sm:$0xff] %vm836, %v713
    %861 = vst.msk [vmem:[%s4 + $0xc0] sm:$0xff] %vm836, %v718
    %862 = vst.msk [vmem:[%s4 + $0xc8] sm:$0xff] %vm836, %v723
    %863 = vst.msk [vmem:[%s4 + $0xd0] sm:$0xff] %vm836, %v728
    %864 = vst.msk [vmem:[%s4 + $0xd8] sm:$0xff] %vm836, %v733
    %865 = vst.msk [vmem:[%s4 + $0xe0] sm:$0xff] %vm836, %v738
    %866 = vst.msk [vmem:[%s4 + $0xe8] sm:$0xff] %vm836, %v743
    %867 = vst.msk [vmem:[%s4 + $0xf0] sm:$0xff] %vm836, %v748
    %868 = vst.msk [vmem:[%s4 + $0xf8] sm:$0xff] %vm836, %v753
    %869 = vst.msk [vmem:[%s4 + $0x100] sm:$0xff] %vm836, %v758
    %870 = vst.msk [vmem:[%s4 + $0x108] sm:$0xff] %vm836, %v763
    %871 = vst.msk [vmem:[%s4 + $0x110] sm:$0xff] %vm836, %v768
    %872 = vst.msk [vmem:[%s4 + $0x118] sm:$0xff] %vm836, %v773
    %873 = vst.msk [vmem:[%s4 + $0x120] sm:$0xff] %vm836, %v778
    %874 = vst.msk [vmem:[%s4 + $0x128] sm:$0xff] %vm836, %v783
    %875 = vst.msk [vmem:[%s4 + $0x130] sm:$0xff] %vm836, %v788
    %876 = vst.msk [vmem:[%s4 + $0x138] sm:$0xff] %vm836, %v793
    %877 = vst.msk [vmem:[%s4 + $0x140] sm:$0xff] %vm836, %v798
    %878 = vst.msk [vmem:[%s4 + $0x148] sm:$0xff] %vm836, %v803
    %879 = vst.msk [vmem:[%s4 + $0x150] sm:$0xff] %vm836, %v808
    %880 = vst.msk [vmem:[%s4 + $0x158] sm:$0xff] %vm836, %v813
    %881 = vst.msk [vmem:[%s4 + $0x160] sm:$0xff] %vm836, %v818
    %882 = vst.msk [vmem:[%s4 + $0x168] sm:$0xff] %vm836, %v823
    %883 = vst.msk [vmem:[%s4 + $0x170] sm:$0xff] %vm836, %v828
    %884 = vst.msk [vmem:[%s4 + $0x178] sm:$0xff] %vm836, %v833
    %v885 = vld [vmem:[%s1] sm:$0x7]
    %v886 = vld [vmem:[%s3] sm:$0x1]
    %v888 = vlaneseq
    %v889 = vshrl.u32 %v888, 7
    %v890 = vsub.s32 0, %v889
    %v891 = vrot.slane %v885, %v890
    %v892 = vlaneseq
    %v893 = vshrl.u32 %v892, 7
    %v894 = vsub.s32 1, %v893
    %v895 = vrot.slane %v885, %v894
    %v896 = vlaneseq
    %v897 = vshrl.u32 %v896, 7
    %v898 = vsub.s32 2, %v897
    %v899 = vrot.slane %v885, %v898
    %903 = vmatprep.subr.mxu0 0.0
    %904 = vmatpush1.msra.mxu0 %v49
    %905 = vmatprep.subr.mxu0 0.0
    %906 = vmatpush1.msra.mxu0 %v48
    %907 = vmatprep.subr.mxu0 0.0
    %908 = vmatpush1.msra.mxu0 %v47
    %909 = vmatprep.subr.mxu0 0.0
    %910 = vmatpush1.msra.mxu0 %v46
    %911 = vmatprep.subr.mxu0 0.0
    %912 = vmatpush1.msra.mxu0 %v45
    %913 = vmatprep.subr.mxu0 0.0
    %914 = vmatpush1.msra.mxu0 %v44
    %915 = vmatprep.subr.mxu0 0.0
    %916 = vmatpush1.msra.mxu0 %v43
    %917 = vmatprep.subr.mxu0 0.0
    %918 = vmatpush1.msra.mxu0 %v42
    %919 = vmatprep.subr.mxu0 0.0
    %920 = vmatpush1.msra.mxu0 %v41
    %921 = vmatprep.subr.mxu0 0.0
    %922 = vmatpush1.msra.mxu0 %v40
    %923 = vmatprep.subr.mxu0 0.0
    %924 = vmatpush1.msra.mxu0 %v39
    %925 = vmatprep.subr.mxu0 0.0
    %926 = vmatpush1.msra.mxu0 %v38
    %927 = vmatprep.subr.mxu0 0.0
    %928 = vmatpush1.msra.mxu0 %v37
    %929 = vmatprep.subr.mxu0 0.0
    %930 = vmatpush1.msra.mxu0 %v36
    %931 = vmatprep.subr.mxu0 0.0
    %932 = vmatpush1.msra.mxu0 %v35
    %933 = vmatprep.subr.mxu0 0.0
    %934 = vmatpush1.msra.mxu0 %v34
    %935 = vmatprep.subr.mxu0 0.0
    %936 = vmatpush2.msra.mxu0 %v65
    %937 = vmatprep.subr.mxu0 0.0
    %938 = vmatpush2.msra.mxu0 %v64
    %939 = vmatprep.subr.mxu0 0.0
    %940 = vmatpush2.msra.mxu0 %v63
    %941 = vmatprep.subr.mxu0 0.0
    %942 = vmatpush2.msra.mxu0 %v62
    %943 = vmatprep.subr.mxu0 0.0
    %944 = vmatpush2.msra.mxu0 %v61
    %945 = vmatprep.subr.mxu0 0.0
    %946 = vmatpush2.msra.mxu0 %v60
    %947 = vmatprep.subr.mxu0 0.0
    %948 = vmatpush2.msra.mxu0 %v59
    %949 = vmatprep.subr.mxu0 0.0
    %950 = vmatpush2.msra.mxu0 %v58
    %951 = vmatprep.subr.mxu0 0.0
    %952 = vmatpush2.msra.mxu0 %v57
    %953 = vmatprep.subr.mxu0 0.0
    %954 = vmatpush2.msra.mxu0 %v56
    %955 = vmatprep.subr.mxu0 0.0
    %956 = vmatpush2.msra.mxu0 %v55
    %957 = vmatprep.subr.mxu0 0.0
    %958 = vmatpush2.msra.mxu0 %v54
    %959 = vmatprep.subr.mxu0 0.0
    %960 = vmatpush2.msra.mxu0 %v53
    %961 = vmatprep.subr.mxu0 0.0
    %962 = vmatpush2.msra.mxu0 %v52
    %963 = vmatprep.subr.mxu0 0.0
    %964 = vmatpush2.msra.mxu0 %v51
    %965 = vmatprep.subr.mxu0 0.0
    %966 = vmatpush2.msra.mxu0 %v50
    %967 = vmatprep.mubr.f32.mxu0 %v895
    %968 = vmatmul.mubr.f32.gmra.mxu0 %v891
    %v969 = vpop.f32.mrf.mxu0
    %v970 = vadd.f32 %v886, %v969
    %v971 = vpop.f32.mrf.mxu0
    %972 = vdwg.mxu0
    %973 = vmatprep.subr.mxu0 0.0
    %974 = vmatpush1.msra.mxu0 %v81
    %975 = vmatprep.subr.mxu0 0.0
    %976 = vmatpush1.msra.mxu0 %v80
    %977 = vmatprep.subr.mxu0 0.0
    %978 = vmatpush1.msra.mxu0 %v79
    %979 = vmatprep.subr.mxu0 0.0
    %980 = vmatpush1.msra.mxu0 %v78
    %981 = vmatprep.subr.mxu0 0.0
    %982 = vmatpush1.msra.mxu0 %v77
    %983 = vmatprep.subr.mxu0 0.0
    %984 = vmatpush1.msra.mxu0 %v76
    %985 = vmatprep.subr.mxu0 0.0
    %986 = vmatpush1.msra.mxu0 %v75
    %987 = vmatprep.subr.mxu0 0.0
    %988 = vmatpush1.msra.mxu0 %v74
    %989 = vmatprep.subr.mxu0 0.0
    %990 = vmatpush1.msra.mxu0 %v73
    %991 = vmatprep.subr.mxu0 0.0
    %992 = vmatpush1.msra.mxu0 %v72
    %993 = vmatprep.subr.mxu0 0.0
    %994 = vmatpush1.msra.mxu0 %v71
    %995 = vmatprep.subr.mxu0 0.0
    %996 = vmatpush1.msra.mxu0 %v70
    %997 = vmatprep.subr.mxu0 0.0
    %998 = vmatpush1.msra.mxu0 %v69
    %999 = vmatprep.subr.mxu0 0.0
    %1000 = vmatpush1.msra.mxu0 %v68
    %1001 = vmatprep.subr.mxu0 0.0
    %1002 = vmatpush1.msra.mxu0 %v67
    %1003 = vmatprep.subr.mxu0 0.0
    %1004 = vmatpush1.msra.mxu0 %v66
    %1005 = vmatprep.subr.mxu0 0.0
    %1006 = vmatpush2.msra.mxu0 0.0
    %1007 = vmatprep.subr.mxu0 0.0
    %1008 = vmatpush2.msra.mxu0 0.0
    %1009 = vmatprep.subr.mxu0 0.0
    %1010 = vmatpush2.msra.mxu0 0.0
    %1011 = vmatprep.subr.mxu0 0.0
    %1012 = vmatpush2.msra.mxu0 0.0
    %1013 = vmatprep.subr.mxu0 0.0
    %1014 = vmatpush2.msra.mxu0 0.0
    %1015 = vmatprep.subr.mxu0 0.0
    %1016 = vmatpush2.msra.mxu0 0.0
    %1017 = vmatprep.subr.mxu0 0.0
    %1018 = vmatpush2.msra.mxu0 0.0
    %1019 = vmatprep.subr.mxu0 0.0
    %1020 = vmatpush2.msra.mxu0 0.0
    %1021 = vmatprep.subr.mxu0 0.0
    %1022 = vmatpush2.msra.mxu0 0.0
    %1023 = vmatprep.subr.mxu0 0.0
    %1024 = vmatpush2.msra.mxu0 0.0
    %1025 = vmatprep.subr.mxu0 0.0
    %1026 = vmatpush2.msra.mxu0 0.0
    %1027 = vmatprep.subr.mxu0 0.0
    %1028 = vmatpush2.msra.mxu0 0.0
    %1029 = vmatprep.subr.mxu0 0.0
    %1030 = vmatpush2.msra.mxu0 0.0
    %1031 = vmatprep.subr.mxu0 0.0
    %1032 = vmatpush2.msra.mxu0 0.0
    %1033 = vmatprep.subr.mxu0 0.0
    %1034 = vmatpush2.msra.mxu0 0.0
    %1035 = vmatprep.subr.mxu0 0.0
    %1036 = vmatpush2.msra.mxu0 0.0
    %1037 = vmatprep.mubr.f32.mxu0 0.0
    %1038 = vmatmul.mubr.f32.gmra.mxu0 %v899
    %v1039 = vpop.f32.mrf.mxu0
    %v1040 = vadd.f32 %v970, %v1039
    %v1041 = vpop.f32.mrf.mxu0
    %1042 = vdwg.mxu0
    %vm1043 = vcmask 8192
    %1044 = vst.msk [vmem:[#allocation5] sm:$0x1] %vm1043, %v1040
    // Predicated region
    $region22: #{tpu_custom_call.1} parent=1 // pred_check
      _
    $region23: #{tpu_custom_call.1} parent=1 // pred_check_branch
      %1046 = sbr.rel (0) target = $region25
    $region24: #{tpu_custom_call.1} parent=1 // pred_region
      _
    $region25: #{tpu_custom_call.1} parent=1 // pred_fallthru
      _
    // Predicated region
    $region26: #{tpu_custom_call.1} parent=1 // pred_check
      _
    $region27: #{tpu_custom_call.1} parent=1 // pred_check_branch
      %1048 = sbr.rel (0) target = $region29
    $region28: #{tpu_custom_call.1} parent=1 // pred_region
      %s1050 = ssub.s32 16, 16
      %1051 = vsyncadd [#allocation4], %s1050
      %s1053 = sshll.u32 [#allocation5], 4
      %s1054 = int_to_ptr.vmem [resolvable:$true] %s1053
      %1056 = dma.vmem_to_hbm [thread:$0]  %s1054, 16, %s5, [#allocation4]
    $region29: #{tpu_custom_call.1} parent=1 // pred_fallthru
      _
    // Predicated region
    $region30: #{tpu_custom_call.1} parent=1 // pred_check
      _
    $region31: #{tpu_custom_call.1} parent=1 // pred_check_branch
      %1058 = sbr.rel (0) target = $region33
    $region32: #{tpu_custom_call.1} parent=1 // pred_region
      _
    $region33: #{tpu_custom_call.1} parent=1 // pred_fallthru
      _
    // Predicated region
    $region34: #{tpu_custom_call.1} parent=1 // pred_check
      _
    $region35: #{tpu_custom_call.1} parent=1 // pred_check_branch
      %1060 = sbr.rel (0) target = $region37
    $region36: #{tpu_custom_call.1} parent=1 // pred_region
      %1061 = dma.done [#allocation4], 16
    $region37: #{tpu_custom_call.1} parent=1 // pred_fallthru
      _
    %1062 = vsyncpa [#allocation3], 1
    %1063 = vsyncpa [#allocation4], 1

</llo_original>
